<compile_context>
chip_gen: v7x
topology: tpu7x:2x2x1
jax: 0.10.0
libtpu: 0.0.40
codegen_flags: <defaults>
</compile_context>

<pallas_src>
import jax
import jax.numpy as jnp
from jax import lax
from jax.experimental import pallas as pl
from jax.experimental.pallas import tpu as pltpu


# ---------------------------------------------------------------------------
# Kernel 1: tiled per-row sum / sum-of-squares (normalization statistics).
# Grid = (row blocks ["parallel"], reduction blocks ["arbitrary", last]).
# ---------------------------------------------------------------------------
def _stats_kernel(x_ref, sum_ref, ssq_ref):
    @pl.when(pl.program_id(1) == 0)
    def _():
        sum_ref[...] = jnp.zeros_like(sum_ref)
        ssq_ref[...] = jnp.zeros_like(ssq_ref)

    x = x_ref[...]
    sum_ref[...] += jnp.sum(x, axis=1, keepdims=True)
    ssq_ref[...] += jnp.sum(x * x, axis=1, keepdims=True)
    # TODO(synk): for very large reduction lengths a two-pass / Welford update would be more
    # accurate than f32 sum / sum-of-squares; fine at these sizes (variance is clamped >= 0).


def _pick_tile(n, align, cap):
    """Largest multiple of `align` that divides n and is <= cap; else the full dim."""
    best = None
    t = align
    while t <= min(n, cap):
        if n % t == 0:
            best = t
        t += align
    return best if best is not None else n


def _row_stats(x2d):
    """Row-wise (sum, sum_of_squares) of a 2-D f32 array via a tiled Pallas reduction."""
    R, L = x2d.shape
    tr = _pick_tile(R, 8, 512)
    tl = _pick_tile(L, 128, 2048)   # (512, 2048) f32 sits near the measured HBM-roofline tile
    sums, ssqs = pl.pallas_call(
        _stats_kernel,
        out_shape=(jax.ShapeDtypeStruct((R, 1), jnp.float32),
                   jax.ShapeDtypeStruct((R, 1), jnp.float32)),
        grid=(R // tr, L // tl),
        in_specs=[pl.BlockSpec((tr, tl), lambda ri, li: (ri, li))],
        out_specs=(pl.BlockSpec((tr, 1), lambda ri, li: (ri, 0)),
                   pl.BlockSpec((tr, 1), lambda ri, li: (ri, 0))),
        compiler_params=pltpu.CompilerParams(
            dimension_semantics=("parallel", "arbitrary")),
    )(x2d)
    return sums[:, 0], ssqs[:, 0]


# ---------------------------------------------------------------------------
# Kernel 2: Conv3d, padding='same', stride 1.
# One grid step = one (n, depth-chunk).  Input block: (TD+2p, Hp, Wp*Cin) — channels folded
# into the lane axis so im2col slabs are wide.  im2col is assembled in a VMEM scratch and
# contracted once on the MXU against the resident folded weight matrix, producing the
# TRANSPOSED (Cout, TD*H*W) block so the store is lane-dense and already NCDHW-ordered.
# ---------------------------------------------------------------------------
def _make_conv_kernel(K, TD, H, W, Cin):
    HW = H * W
    WC = W * Cin
    KC = K * Cin

    def kernel(x_ref, w_ref, b_ref, o_ref, cols_ref):
        # x_ref   : (TD+2p, Hp, Wp*Cin)  conv dtype (bf16 default) — one contiguous chunk
        # w_ref   : (Cout, K^3*Cin)      conv dtype, columns ordered (kd, kh, kw, ci), resident
        # b_ref   : (Cout, 1)            f32, resident
        # o_ref   : (Cout, TD*H*W)       f32, lane-dense, written exactly once
        # cols_ref: (TD*H*W, K^3*Cin)    VMEM scratch for the im2col block
        for kd in range(K):
            for kh in range(K):
                # One wide slab load per (kd, kh); stays in the conv dtype (no f32 round trip).
                slab = x_ref[kd:kd + TD, kh:kh + H, :]                  # (TD, H, Wp*Cin)
                mini = jnp.concatenate(
                    [lax.slice(slab, (0, 0, kw * Cin),
                               (TD, H, kw * Cin + WC)).reshape(TD * HW, Cin)
                     for kw in range(K)], axis=1)                       # (TD*HW, K*Cin)
                c0 = (kd * K + kh) * KC
                cols_ref[:, c0:c0 + KC] = mini
                # TODO(synk): a roll/gather-based build could avoid the per-kw lane->sublane
                # relayouts entirely; not the bottleneck at these sizes.

        # Single MXU contraction, transposed product: (Cout, K^3*Cin) x (TD*HW, K^3*Cin)^T.
        acc = lax.dot_general(w_ref[...], cols_ref[...],
                              dimension_numbers=(((1,), (1,)), ((), ())),
                              preferred_element_type=jnp.float32)       # (Cout, TD*HW) f32
        o_ref[...] = acc + b_ref[...]

    return kernel


def _pick_depth_tile(D, p, Hp, WpC, HW, K3C, Cout, itemsize, budget=12 * 1024 * 1024):
    """Largest depth chunk TD (divisor of D) whose per-step working set fits the budget."""
    def step_bytes(td):
        tdp = td + 2 * p
        return (2 * tdp * Hp * WpC * itemsize      # double-buffered input chunk
                + 2 * Cout * td * HW * 4           # double-buffered output block (f32)
                + td * HW * K3C * itemsize)        # im2col VMEM scratch
    if step_bytes(D) <= budget:
        return D                                   # fewest chunks -> zero halo duplication
    for td in range(D - 1, 0, -1):
        if D % td == 0 and (td * HW) % 128 == 0 and step_bytes(td) <= budget:
            return td
    return D  # TODO(synk): extreme volumes would need an H-tile axis too; not hit here.


# ---------------------------------------------------------------------------
# Module-level wrapper
# ---------------------------------------------------------------------------
def batch_norm_conv(x, gamma, beta, w, b, use_norm="BatchNorm",
                    conv_dtype=jnp.bfloat16, eps=1e-5):
    """Forward pass equivalent to BatchNormConv.forward (module in training mode).

    x: (N, Cin, D, H, W) f32; w: (Cout, Cin, K, K, K); b: (Cout,); gamma/beta: (Cin,)
    (BatchNorm affine params; unused for InstanceNorm/None).  Returns (N, Cout, D, H, W) f32.
    conv_dtype=bfloat16 (default) halves the HBM read bytes of the dominant conv input
    stream; the MXU accumulation stays f32 either way.
    """
    N, C, D, H, W = x.shape
    Cout, Cin, K, Kh, Kw = w.shape
    assert C == Cin and K == Kh == Kw
    assert K % 2 == 1, "padding='same' implemented for odd kernel sizes"
    x = x.astype(jnp.float32)

    # --- normalization statistics (tiled Pallas reduction on the raw NCDHW layout) ---
    scale = shift = None
    if use_norm in ("BatchNorm", "InstanceNorm"):
        L = D * H * W
        sums, ssqs = _row_stats(x.reshape(N * C, L))              # per-(n, c)
        if use_norm == "BatchNorm":
            # Training-mode batch statistics: per channel over (N, D, H, W), biased var.
            cnt = float(N * L)
            mean = jnp.sum(sums.reshape(N, C), axis=0) / cnt
            var = jnp.maximum(jnp.sum(ssqs.reshape(N, C), axis=0) / cnt - mean * mean, 0.0)
            s = gamma * lax.rsqrt(var + eps)
            scale = s.reshape(1, 1, 1, 1, C)
            shift = (beta - mean * s).reshape(1, 1, 1, 1, C)
        else:
            # nn.InstanceNorm3d default: per-(n, c) statistics, affine=False, biased var.
            mean = sums.reshape(N, C) / float(L)
            var = jnp.maximum(ssqs.reshape(N, C) / float(L) - mean * mean, 0.0)
            s = lax.rsqrt(var + eps)
            scale = s.reshape(N, 1, 1, 1, C)
            shift = (-mean * s).reshape(N, 1, 1, 1, C)
    elif use_norm != "None":
        raise ValueError("Pick an available Normalization Method")
    # TODO(synk): eval-mode BatchNorm (running-stats) path not implemented; training-mode
    # batch statistics are used, matching a freshly-constructed torch module in train().

    # --- channels-last + 'same' zero pad; the norm affine is fused into this one pass,
    #     applied BEFORE padding so border taps see exactly zero (matches the module). ---
    # TODO(synk): at large volumes the affine could be fused into the conv kernel (with halo
    # masking so padded taps stay exactly zero) to save one input HBM round trip.
    p = (K - 1) // 2
    xl = jnp.transpose(x, (0, 2, 3, 4, 1))                        # NDHWC
    if scale is not None:
        xl = xl * scale + shift                                   # == bn(x)
    zp = jnp.pad(xl.astype(conv_dtype),
                 ((0, 0), (p, p), (p, p), (p, p), (0, 0)))        # (N, Dp, Hp, Wp, Cin)

    Hp, Wp = H + 2 * p, W + 2 * p
    HW = H * W
    K3C = K ** 3 * Cin
    itemsize = jnp.dtype(conv_dtype).itemsize

    # --- depth chunking (TD == D at these sizes -> no halo duplication, grid=(N, 1)) ---
    TD = _pick_depth_tile(D, p, Hp, Wp * Cin, HW, K3C, Cout, itemsize)
    n_dc = D // TD
    TDp = TD + 2 * p
    if n_dc == 1:
        xc = zp[:, None]                                          # (N, 1, Dp, Hp, Wp, Cin)
    else:
        xc = jnp.stack([zp[:, c * TD:c * TD + TDp] for c in range(n_dc)], axis=1)
    xc = xc.reshape(N, n_dc, TDp, Hp, Wp * Cin)                   # channels folded into lanes

    # --- fold weights into one (Cout, K^3*Cin) matrix, column order (kd, kh, kw, ci) ---
    wmat = jnp.transpose(w, (0, 2, 3, 4, 1)).reshape(Cout, K3C).astype(conv_dtype)
    bias = b.reshape(Cout, 1).astype(jnp.float32)

    kernel = _make_conv_kernel(K, TD, H, W, Cin)

    out = pl.pallas_call(
        kernel,
        out_shape=jax.ShapeDtypeStruct((N, Cout, D * HW), jnp.float32),
        grid=(N, n_dc),                                           # >= 2 parallel steps here
        in_specs=[
            pl.BlockSpec((None, None, TDp, Hp, Wp * Cin), lambda n, c: (n, c, 0, 0, 0)),
            # constant index maps -> weights / bias stay resident in VMEM (no re-DMA).
            pl.BlockSpec((Cout, K3C), lambda n, c: (0, 0)),
            pl.BlockSpec((Cout, 1), lambda n, c: (0, 0)),
        ],
        out_specs=pl.BlockSpec((None, Cout, TD * HW), lambda n, c: (n, 0, c)),
        scratch_shapes=[pltpu.VMEM((TD * HW, K3C), conv_dtype)],
        compiler_params=pltpu.CompilerParams(
            dimension_semantics=("parallel", "parallel"),         # shards over v7x's 2 TCs
            vmem_limit_bytes=32 * 1024 * 1024),                   # safe on v5e/v6e/v7x
    )(xc, wmat, bias)

    # Output already NCDHW-ordered: pure reshape, no transpose / extra HBM pass.
    return out.reshape(N, Cout, D, H, W)


# ---------------------------------------------------------------------------
# Pure-JAX reference (numerical sanity check)
# ---------------------------------------------------------------------------
def _reference(x, gamma, beta, w, b, use_norm):
    if use_norm == "BatchNorm":
        mean = x.mean(axis=(0, 2, 3, 4), keepdims=True)
        var = ((x - mean) ** 2).mean(axis=(0, 2, 3, 4), keepdims=True)
        xn = (x - mean) * lax.rsqrt(var + 1e-5)
        xn = xn * gamma.reshape(1, -1, 1, 1, 1) + beta.reshape(1, -1, 1, 1, 1)
    elif use_norm == "InstanceNorm":
        mean = x.mean(axis=(2, 3, 4), keepdims=True)
        var = ((x - mean) ** 2).mean(axis=(2, 3, 4), keepdims=True)
        xn = (x - mean) * lax.rsqrt(var + 1e-5)
    else:
        xn = x
    K = w.shape[2]
    p = (K - 1) // 2
    out = lax.conv_general_dilated(
        xn, w, window_strides=(1, 1, 1), padding=[(p, p)] * 3,
        dimension_numbers=("NCDHW", "OIDHW", "NCDHW"),
        precision=lax.Precision.HIGHEST)
    return out + b.reshape(1, -1, 1, 1, 1)


if __name__ == "__main__":
    N, Cin, Cout, D, H, W, K = 2, 4, 8, 8, 8, 8, 3

    key = jax.random.PRNGKey(0)
    k1, k2, k3, k4, k5 = jax.random.split(key, 5)
    x = jax.random.normal(k1, (N, Cin, D, H, W), jnp.float32)
    # BatchNorm3d affine params (deterministic, slightly perturbed from torch defaults).
    gamma = 1.0 + 0.1 * jax.random.normal(k2, (Cin,), jnp.float32)
    beta = 0.1 * jax.random.normal(k3, (Cin,), jnp.float32)
    # Conv3d params (kaiming-uniform-like scale, deterministic).
    bound = (1.0 / (Cin * K ** 3)) ** 0.5
    w = jax.random.uniform(k4, (Cout, Cin, K, K, K), jnp.float32, -bound, bound)
    b = jax.random.uniform(k5, (Cout,), jnp.float32, -bound, bound)

    # f32 conv-operand path: all three normalization modes vs pure-JAX reference (tight tol).
    for mode in ("BatchNorm", "InstanceNorm", "None"):
        out = jax.block_until_ready(
            batch_norm_conv(x, gamma, beta, w, b, use_norm=mode, conv_dtype=jnp.float32))
        assert out.shape == (N, Cout, D, H, W)
        ref = _reference(x, gamma, beta, w, b, mode)
        assert jnp.allclose(out, ref, rtol=1e-3, atol=1e-3), f"{mode}: mismatch vs reference"

    # Default bf16 conv-operand path (f32 accumulation) — looser tolerance.
    out_bf16 = jax.block_until_ready(
        batch_norm_conv(x, gamma, beta, w, b, use_norm="BatchNorm"))
    ref = _reference(x, gamma, beta, w, b, "BatchNorm")
    assert out_bf16.shape == (N, Cout, D, H, W)
    assert jnp.allclose(out_bf16, ref, rtol=3e-2, atol=3e-2), "bf16: mismatch vs reference"

    print("KERNEL_OK")
</pallas_src>

<mosaic_0001>
module attributes {stable_mosaic.version = 11 : i64} {
  func.func @_stats_kernel(%arg0: i32, %arg1: i32, %arg2: memref<8x512xf32, #tpu.memory_space<vmem>>, %arg3: memref<8x1xf32, #tpu.memory_space<vmem>>, %arg4: memref<8x1xf32, #tpu.memory_space<vmem>>) attributes {dimension_semantics = [#tpu.dimension_semantics<parallel>, #tpu.dimension_semantics<arbitrary>], iteration_bounds = array<i64: 1, 1>, scalar_prefetch = 0 : i64, scratch_operands = 0 : i64, tpu.core_type = #tpu.core_type<tc>, window_params = [{transform_indices = @transform_0, window_bounds = array<i64: 8, 512>}, {transform_indices = @transform_1, window_bounds = array<i64: 8, 1>}, {transform_indices = @transform_2, window_bounds = array<i64: 8, 1>}]} {
    %c0_i32 = arith.constant 0 : i32
    %0 = arith.cmpi eq, %arg1, %c0_i32 : i32
    %1 = arith.extui %0 : i1 to i32
    %c0_i32_0 = arith.constant 0 : i32
    %2 = arith.cmpi ne, %1, %c0_i32_0 : i32
    scf.if %2 {
      %cst_11 = arith.constant 0.000000e+00 : f32
      %15 = vector.broadcast %cst_11 : f32 to vector<8x1xf32>
      %c0_12 = arith.constant 0 : index
      %c0_13 = arith.constant 0 : index
      %16 = vector.load %arg3[%c0_12, %c0_13] : memref<8x1xf32, #tpu.memory_space<vmem>>, vector<8x1xf32>
      tpu.vector_store %arg3[%c0_12, %c0_13], %15 {strides = array<i32>} : memref<8x1xf32, #tpu.memory_space<vmem>>, vector<8x1xf32>,
      %cst_14 = arith.constant 0.000000e+00 : f32
      %17 = vector.broadcast %cst_14 : f32 to vector<8x1xf32>
      %c0_15 = arith.constant 0 : index
      %c0_16 = arith.constant 0 : index
      %18 = vector.load %arg4[%c0_15, %c0_16] : memref<8x1xf32, #tpu.memory_space<vmem>>, vector<8x1xf32>
      tpu.vector_store %arg4[%c0_15, %c0_16], %17 {strides = array<i32>} : memref<8x1xf32, #tpu.memory_space<vmem>>, vector<8x1xf32>,
    } else {
    }
    %c0 = arith.constant 0 : index
    %c0_1 = arith.constant 0 : index
    %3 = vector.load %arg2[%c0, %c0_1] : memref<8x512xf32, #tpu.memory_space<vmem>>, vector<8x512xf32>
    %c0_2 = arith.constant 0 : index
    %c0_3 = arith.constant 0 : index
    %4 = vector.load %arg3[%c0_2, %c0_3] : memref<8x1xf32, #tpu.memory_space<vmem>>, vector<8x1xf32>
    %cst = arith.constant dense<0.000000e+00> : vector<8xf32>
    %5 = vector.multi_reduction <add>, %3, %cst [1] : vector<8x512xf32> to vector<8xf32>
    %6 = vector.shape_cast %5 : vector<8xf32> to vector<8x1xf32>
    %7 = arith.addf %4, %6 : vector<8x1xf32>
    %c0_4 = arith.constant 0 : index
    %c0_5 = arith.constant 0 : index
    %8 = vector.load %arg3[%c0_4, %c0_5] : memref<8x1xf32, #tpu.memory_space<vmem>>, vector<8x1xf32>
    tpu.vector_store %arg3[%c0_4, %c0_5], %7 {strides = array<i32>} : memref<8x1xf32, #tpu.memory_space<vmem>>, vector<8x1xf32>,
    %c0_6 = arith.constant 0 : index
    %c0_7 = arith.constant 0 : index
    %9 = vector.load %arg4[%c0_6, %c0_7] : memref<8x1xf32, #tpu.memory_space<vmem>>, vector<8x1xf32>
    %10 = arith.mulf %3, %3 : vector<8x512xf32>
    %cst_8 = arith.constant dense<0.000000e+00> : vector<8xf32>
    %11 = vector.multi_reduction <add>, %10, %cst_8 [1] : vector<8x512xf32> to vector<8xf32>
    %12 = vector.shape_cast %11 : vector<8xf32> to vector<8x1xf32>
    %13 = arith.addf %9, %12 : vector<8x1xf32>
    %c0_9 = arith.constant 0 : index
    %c0_10 = arith.constant 0 : index
    %14 = vector.load %arg4[%c0_9, %c0_10] : memref<8x1xf32, #tpu.memory_space<vmem>>, vector<8x1xf32>
    tpu.vector_store %arg4[%c0_9, %c0_10], %13 {strides = array<i32>} : memref<8x1xf32, #tpu.memory_space<vmem>>, vector<8x1xf32>,
    return
  }
  func.func @transform_0(%arg0: i32, %arg1: i32) -> (i32, i32) {
    %c0_i32 = arith.constant 0 : i32
    return %arg0, %arg1 : i32, i32
  }
  func.func @transform_1(%arg0: i32, %arg1: i32) -> (i32, i32) {
    %c0_i32 = arith.constant 0 : i32
    %c0_i32_0 = arith.constant 0 : i32
    return %arg0, %c0_i32 : i32, i32
  }
  func.func @transform_2(%arg0: i32, %arg1: i32) -> (i32, i32) {
    %c0_i32 = arith.constant 0 : i32
    %c0_i32_0 = arith.constant 0 : i32
    return %arg0, %c0_i32 : i32, i32
  }
}

</mosaic_0001>

<llo_original>
// kernel: tpu_custom_call.1
$region0: #{tpu_custom_call.1}
  #allocation0 [shape = 'u32[]', space=smem, size = 0x4, offset = 0x4, fixed_abs, tag = 'smem constant byte address 0x4 - core index']
  #allocation1 [shape = 'u32[144,128]{1,0:T(1,128)}', space=vmem, size = 0x12000, scoped, tag = 'internal scratch']
  %s0 = inlined_call_operand.hbm [shape: f32[8,512], index: 0, kind: input, shape index: {}]
  %s1 = inlined_call_operand.vmem [shape: f32[8,1], index: 1, kind: output, shape index: {0}]
  %s2 = inlined_call_operand.vmem [shape: f32[8,1], index: 2, kind: output, shape index: {1}]
  %3 = xla_tuple %s1, %s2
  %s4 = sld [smem:[#allocation0]]
  $region30: #{tpu_custom_call.1} parent=0
    _
  %s6 = ssub.s32 1, %s4
  %s7 = scalar_select 0, %s6, %s4
  $region1: #{tpu_custom_call.1} parent=0
    #allocation2 [shape = 'u8[16384]{0}', space=vmem, size = 0x4000, scoped, tag = 'input window, operand 0, single buffered']
    #allocation3 [shape = 's32[1]{0}', space=sflag, size = 0x4, scoped, tag = 'scoped memory for tpu_custom_call.1']
    %8 = vsyncpa [#allocation3], 0
    // Predicated region
    $region2: #{tpu_custom_call.1} parent=1 // pred_check
      _
    $region3: #{tpu_custom_call.1} parent=1 // pred_check_branch
      %10 = sbr.rel (0) target = $region5
    $region4: #{tpu_custom_call.1} parent=1 // pred_region
      %s12 = ssub.s32 512, 512
      %13 = vsyncadd [#allocation3], %s12
      %s15 = sshll.u32 [#allocation2], 4
      %s16 = int_to_ptr.vmem [resolvable:$true] %s15
      %18 = dma.hbm_to_vmem [thread:$0]  %s0, 512, %s16, [#allocation3]
    $region5: #{tpu_custom_call.1} parent=1 // pred_fallthru
      _
    // Predicated region
    $region6: #{tpu_custom_call.1} parent=1 // pred_check
      _
    $region7: #{tpu_custom_call.1} parent=1 // pred_check_branch
      %20 = sbr.rel (0) target = $region9
    $region8: #{tpu_custom_call.1} parent=1 // pred_region
      %21 = dma.done [#allocation3], 512
    $region9: #{tpu_custom_call.1} parent=1 // pred_fallthru
      _
    %p22 = scmp.eq.s32.totalorder 0, 0
    // Predicated region
    $region10: #{tpu_custom_call.1} parent=1 // pred_check
      %p23 = pneg %p22
    $region11: #{tpu_custom_call.1} parent=1 // pred_check_branch
      %25 = sbr.rel (%p23) target = $region13
    $region12: #{tpu_custom_call.1} parent=1 // pred_region
      %vm26 = vcmask 7168
      %27 = vst.msk [vmem:[%s1] sm:$0xff] %vm26, 0.0
      %28 = vst.msk [vmem:[%s2] sm:$0xff] %vm26, 0.0
    $region13: #{tpu_custom_call.1} parent=1 // pred_fallthru
      _
    %v29 = vld [vmem:[#allocation2] sm:$0xff]
    %v30 = vld [vmem:[#allocation2 + $0x8] sm:$0xff]
    %v31 = vld [vmem:[#allocation2 + $0x10] sm:$0xff]
    %v32 = vld [vmem:[#allocation2 + $0x18] sm:$0xff]
    %v33 = vld [vmem:[%s1] sm:$0xff]
    %v34 = vadd.f32 %v29, %v30
    %v35 = vadd.f32 %v34, %v31
    %v36 = vadd.f32 %v35, %v32
    %37 = vadd.xlane.f32.xlu0 %v36
    %v38 = vpop.xlane.xlu0 %37
    %v39 = vadd.f32 %v33, %v38
    %vm40 = vcmask 7168
    %41 = vst.msk [vmem:[%s1] sm:$0xff] %vm40, %v39
    %v42 = vld [vmem:[%s2] sm:$0xff]
    %v43 = vmul.f32 %v29, %v29
    %v44 = vmul.f32 %v30, %v30
    %v45 = vmul.f32 %v31, %v31
    %v46 = vmul.f32 %v32, %v32
    %v47 = vadd.f32 %v43, %v44
    %v48 = vadd.f32 %v47, %v45
    %v49 = vadd.f32 %v48, %v46
    %50 = vadd.xlane.f32.xlu0 %v49
    %v51 = vpop.xlane.xlu0 %50
    %v52 = vadd.f32 %v42, %v51
    %53 = vst.msk [vmem:[%s2] sm:$0xff] %vm40, %v52
    // Predicated region
    $region14: #{tpu_custom_call.1} parent=1 // pred_check
      _
    $region15: #{tpu_custom_call.1} parent=1 // pred_check_branch
      %55 = sbr.rel (0) target = $region17
    $region16: #{tpu_custom_call.1} parent=1 // pred_region
      _
    $region17: #{tpu_custom_call.1} parent=1 // pred_fallthru
      _
    // Predicated region
    $region18: #{tpu_custom_call.1} parent=1 // pred_check
      _
    $region19: #{tpu_custom_call.1} parent=1 // pred_check_branch
      %57 = sbr.rel (0) target = $region21
    $region20: #{tpu_custom_call.1} parent=1 // pred_region
      _
    $region21: #{tpu_custom_call.1} parent=1 // pred_fallthru
      _
    // Predicated region
    $region22: #{tpu_custom_call.1} parent=1 // pred_check
      _
    $region23: #{tpu_custom_call.1} parent=1 // pred_check_branch
      %59 = sbr.rel (0) target = $region25
    $region24: #{tpu_custom_call.1} parent=1 // pred_region
      _
    $region25: #{tpu_custom_call.1} parent=1 // pred_fallthru
      _
    // Predicated region
    $region26: #{tpu_custom_call.1} parent=1 // pred_check
      _
    $region27: #{tpu_custom_call.1} parent=1 // pred_check_branch
      %61 = sbr.rel (0) target = $region29
    $region28: #{tpu_custom_call.1} parent=1 // pred_region
      _
    $region29: #{tpu_custom_call.1} parent=1 // pred_fallthru
      _
    %62 = vsyncpa [#allocation3], 1

</llo_original>
